<compile_context>
chip_gen: v7x
topology: tpu7x:2x2x1
jax: 0.10.0
libtpu: 0.0.40
codegen_flags: <defaults>
</compile_context>

<pallas_src>
import functools

import jax
import jax.numpy as jnp
from jax.experimental import pallas as pl
from jax.experimental.pallas import tpu as pltpu


def _force_pair(v):
    if isinstance(v, (tuple, list)):
        assert len(v) == 2
        return (int(v[0]), int(v[1]))
    return (int(v), int(v))


def _round_up(a, b):
    return -(-a // b) * b


@functools.lru_cache(maxsize=1)
def _vmem_limit_bytes():
    """Generation-aware scoped-VMEM limit (~75% of physical, capped)."""
    cap = 64 * 1024 * 1024            # conservative fallback (v7x physical)
    try:
        info = pltpu.get_tpu_info()
        c = getattr(info, "vmem_capacity_bytes", None)
        if c:
            cap = int(c)
    except Exception:
        pass
    # v5e/v6e (128 MiB physical) -> 96 MiB, v7x (64 MiB physical) -> 48 MiB.
    return min(cap * 3 // 4, 100 * 1024 * 1024)


# ---------------------------------------------------------------------------
# Pallas kernels: G-batched tiled matmul  (M, K) @ (K, N) -> (M, N)
# ---------------------------------------------------------------------------
def _mm_kernel_single_k(x_ref, w_ref, o_ref):
    # Whole contraction in one block: no accumulator scratch, no init/finalize.
    o_ref[...] = jnp.dot(x_ref[...], w_ref[...],
                         preferred_element_type=jnp.float32).astype(o_ref.dtype)


def _mm_kernel_multi_k(x_ref, w_ref, o_ref, acc_ref):
    k = pl.program_id(3)

    @pl.when(k == 0)
    def _():
        acc_ref[...] = jnp.zeros_like(acc_ref)

    acc_ref[...] += jnp.dot(x_ref[...], w_ref[...],
                            preferred_element_type=jnp.float32)

    @pl.when(k == pl.num_programs(3) - 1)
    def _():
        o_ref[...] = acc_ref[...].astype(o_ref.dtype)


def _batched_matmul_pallas(x_cols, w_mats, out_dtype):
    """(G, M, K) @ (G, K, OC) -> (G, M, OC) with f32 accumulation on the MXU.

    Tiled over M, N(=OC) and K with a leading sub-problem grid axis, so all
    sh*sw sub-problems of a ConvTranspose2d run inside one pallas_call.
    """
    G, M, K = map(int, x_cols.shape)
    G2, K2, OC = map(int, w_mats.shape)
    assert G == G2 and K == K2

    in_b = jnp.dtype(x_cols.dtype).itemsize
    out_b = jnp.dtype(out_dtype).itemsize
    sub = 8 if in_b >= 4 else (16 if in_b == 2 else 32)

    vmem_limit = _vmem_limit_bytes()
    tile_budget = int(vmem_limit * 0.8)

    # --- N (out-channel) tile: lane-dense, bounds VMEM independently of OC.
    tn_cap = 1024 if in_b <= 2 else 512
    OCp = _round_up(OC, 128)
    if OCp <= tn_cap:
        TN = OCp
    else:
        TN = tn_cap
        OCp = _round_up(OCp, TN)
    nb = OCp // TN

    # --- M tile.
    TM = min(1024 if in_b <= 2 else 512, _round_up(M, sub))
    if G * nb == 1 and M > sub:
        # Guarantee >=2 parallel blocks so both v7x TensorCores get work.
        TM = min(TM, _round_up(-(-M // 2), sub))

    def vmem_bytes(tm, tk, tn, multi_k):
        b = 2 * tm * tk * in_b + 2 * tk * tn * in_b + 2 * tm * tn * out_b
        if multi_k:
            b += tm * tn * 4
        return b

    # --- K tile: keep the whole contraction (hence the weight block) resident
    #     whenever it fits the budget; otherwise 128-aligned chunks.
    Kp_full = _round_up(K, sub)
    if vmem_bytes(TM, Kp_full, TN, False) <= tile_budget:
        TK = Kp = Kp_full
    else:
        TK = min(512, _round_up(K, 128))
        while vmem_bytes(TM, TK, TN, True) > tile_budget and TK > 128:
            TK //= 2
        while vmem_bytes(TM, TK, TN, True) > tile_budget and TM > sub:
            TM = max(sub, _round_up(TM // 2, sub))
        Kp = _round_up(K, TK)

    Mp = _round_up(M, TM)
    mb, kb = Mp // TM, Kp // TK

    if (Mp, Kp) != (M, K):
        x_cols = jnp.pad(x_cols, ((0, 0), (0, Mp - M), (0, Kp - K)))
    if (Kp, OCp) != (K, OC):
        w_mats = jnp.pad(w_mats, ((0, 0), (0, Kp - K), (0, OCp - OC)))
    x2 = x_cols.reshape(G * Mp, Kp)
    w2 = w_mats.reshape(G * Kp, OCp)

    cost = pl.CostEstimate(
        flops=2 * G * Mp * Kp * OCp,
        bytes_accessed=G * (Mp * Kp * in_b + Kp * OCp * in_b + Mp * OCp * out_b),
        transcendentals=0)

    if kb == 1:
        grid = (G, nb, mb)
        in_specs = [
            pl.BlockSpec((TM, Kp), lambda g, n, m: (g * mb + m, 0)),
            pl.BlockSpec((Kp, TN), lambda g, n, m: (g, n)),
        ]
        out_specs = pl.BlockSpec((TM, TN), lambda g, n, m: (g * mb + m, n))
        kernel = _mm_kernel_single_k
        scratch = []
        semantics = ("parallel", "parallel", "parallel")
    else:
        grid = (G, nb, mb, kb)                       # reduction axis last
        in_specs = [
            pl.BlockSpec((TM, TK), lambda g, n, m, k: (g * mb + m, k)),
            pl.BlockSpec((TK, TN), lambda g, n, m, k: (g * kb + k, n)),
        ]
        out_specs = pl.BlockSpec((TM, TN), lambda g, n, m, k: (g * mb + m, n))
        kernel = _mm_kernel_multi_k
        scratch = [pltpu.VMEM((TM, TN), jnp.float32)]
        semantics = ("parallel", "parallel", "parallel", "arbitrary")

    out = pl.pallas_call(
        kernel,
        out_shape=jax.ShapeDtypeStruct((G * Mp, OCp), out_dtype),
        grid_spec=pltpu.PrefetchScalarGridSpec(
            num_scalar_prefetch=0,
            grid=grid,
            in_specs=in_specs,
            out_specs=out_specs,
            scratch_shapes=scratch),
        compiler_params=pltpu.CompilerParams(
            dimension_semantics=semantics,
            vmem_limit_bytes=vmem_limit),
        cost_estimate=cost,
    )(x2, w2)

    return out.reshape(G, Mp, OCp)[:, :M, :OC]


# ---------------------------------------------------------------------------
# conv_transpose2d wrapper (glue in plain JAX, FLOP hot path in Pallas)
# ---------------------------------------------------------------------------
def conv_transpose2d_pallas(x, weight, stride=1, padding=0, *, input_dtype=None):
    """ConvTranspose2d forward (bias=False), matching torch's conv_transpose2d.

    x:      (B, IC, H, W)
    weight: (IC, OC, KH, KW)

    `input_dtype=jnp.bfloat16` runs the MXU in bf16 on any TPU generation
    (v5e/v6e/v7x all have native bf16 MXUs; it halves HBM traffic).
    Accumulation is always f32, so bf16 is slightly lossy vs a full-f32
    reference.  output_padding / dilation / groups / bias are not supported
    (same feature set as the reference module).
    """
    assert x.ndim == 4 and weight.ndim == 4, "expected NCHW input and 4-D weight"
    sh, sw = _force_pair(stride)
    ph, pw = _force_pair(padding)
    B, IC, H, W = map(int, x.shape)
    IC2, OC, KH, KW = map(int, weight.shape)
    assert IC == IC2, "in_channels mismatch between x and weight"

    pe_h = KH - 1 - ph
    pe_w = KW - 1 - pw
    assert min(pe_h, pe_w) >= 0, "total amount padded should be positive"

    OH = (H - 1) * sh + KH - 2 * ph
    OW = (W - 1) * sw + KW - 2 * pw

    cdt = x.dtype if input_dtype is None else jnp.dtype(input_dtype)
    x_nhwc = jnp.transpose(x, (0, 2, 3, 1)).astype(cdt)              # (B, H, W, IC)
    # Flipped, conv-style kernel: wf[kh, kw, ic, oc] = weight[ic, oc, KH-1-kh, KW-1-kw]
    wf = jnp.flip(weight, axis=(-2, -1)).transpose(2, 3, 0, 1).astype(cdt)

    # Per-sub-problem geometry: output rows oh = r + sh*q only see kernel taps
    # kh = kh0 + sh*t_h and input rows h = q + t_h + d_h (cols analogous).
    def _geom(r, c):
        kh0 = (pe_h - r) % sh
        kw0 = (pe_w - c) % sw
        T_h = len(range(kh0, KH, sh))
        T_w = len(range(kw0, KW, sw))
        OH_r = len(range(r, OH, sh))
        OW_c = len(range(c, OW, sw))
        d_h = (r + kh0 - pe_h) // sh                                  # exact integer
        d_w = (c + kw0 - pe_w) // sw
        return kh0, kw0, T_h, T_w, OH_r, OW_c, d_h, d_w

    geoms = {(r, c): _geom(r, c) for r in range(sh) for c in range(sw)}

    # Pad the input ONCE with the max extents over all sub-problems
    # (instead of one jnp.pad per (r, c)).
    Lh = Rh = Lw = Rw = 0
    for (kh0, kw0, T_h, T_w, OH_r, OW_c, d_h, d_w) in geoms.values():
        if min(T_h, T_w, OH_r, OW_c) == 0:
            continue
        Lh = max(Lh, -d_h)
        Lw = max(Lw, -d_w)
        Rh = max(Rh, (OH_r - 1) + (T_h - 1) + d_h - (H - 1))
        Rw = max(Rw, (OW_c - 1) + (T_w - 1) + d_w - (W - 1))
    xp = x_nhwc
    if Lh or Rh or Lw or Rw:
        xp = jnp.pad(x_nhwc, ((0, 0), (Lh, Rh), (Lw, Rw), (0, 0)))

    def _build_cols(T_h, T_w, OH_r, OW_c, d_h, d_w):
        # im2col with all taps folded into the contraction axis.
        # TODO(synk): move this tap gather into the Pallas kernel (tap grid
        # axis reading xp through element-offset windows / manual DMA) to drop
        # the remaining T_h*T_w x duplication of input HBM bytes plus the slab
        # write+read; the wrapper-side gather is kept here for robustness.
        slabs = []
        for t_h in range(T_h):
            hs = t_h + d_h + Lh
            for t_w in range(T_w):
                ws = t_w + d_w + Lw
                slabs.append(xp[:, hs:hs + OH_r, ws:ws + OW_c, :])
        cols = slabs[0] if len(slabs) == 1 else jnp.concatenate(slabs, axis=-1)
        return cols.reshape(B * OH_r * OW_c, T_h * T_w * IC)

    uniform = (KH % sh == 0 and KW % sw == 0
               and OH % sh == 0 and OW % sw == 0
               and OH >= sh and OW >= sw)

    if uniform:
        # Fused path: one pallas_call over all sh*sw sub-problems; output is
        # assembled with a single reshape/transpose (no strided scatters).
        OH_r, OW_c = OH // sh, OW // sw
        T_h, T_w = KH // sh, KW // sw
        Kdim = T_h * T_w * IC
        cols_list, w_list = [], []
        for r in range(sh):
            for c in range(sw):
                kh0, kw0, th, tw, ohr, owc, d_h, d_w = geoms[(r, c)]
                assert (th, tw, ohr, owc) == (T_h, T_w, OH_r, OW_c)
                cols_list.append(_build_cols(T_h, T_w, OH_r, OW_c, d_h, d_w))
                w_list.append(wf[kh0::sh, kw0::sw].reshape(Kdim, OC))
        x_cols = jnp.stack(cols_list, axis=0)                        # (G, M, K)
        w_mats = jnp.stack(w_list, axis=0)                           # (G, K, OC)
        res = _batched_matmul_pallas(x_cols, w_mats, x.dtype)        # (G, M, OC)
        res = res.reshape(sh, sw, B, OH_r, OW_c, OC)
        # (r, c, b, q, p, oc) -> (b, oc, q, r, p, c) -> (B, OC, OH, OW)
        return res.transpose(2, 5, 3, 0, 4, 1).reshape(B, OC, OH, OW)

    # Fallback (non-uniform sub-pixel split): per-sub-problem matmul + scatter.
    out_nhwc = jnp.zeros((B, OH, OW, OC), x.dtype)
    for r in range(sh):
        for c in range(sw):
            kh0, kw0, T_h, T_w, OH_r, OW_c, d_h, d_w = geoms[(r, c)]
            if min(T_h, T_w, OH_r, OW_c) == 0:
                continue
            cols = _build_cols(T_h, T_w, OH_r, OW_c, d_h, d_w)[None]  # (1, M, K)
            wm = wf[kh0::sh, kw0::sw].reshape(T_h * T_w * IC, OC)[None]
            res = _batched_matmul_pallas(cols, wm, x.dtype)[0]
            res = res.reshape(B, OH_r, OW_c, OC)
            out_nhwc = out_nhwc.at[:, r::sh, c::sw, :].set(res)
    return jnp.transpose(out_nhwc, (0, 3, 1, 2))                     # (B, OC, OH, OW)


class ConvTranspose2dPallas:
    """Mirror of the PyTorch ConvTranspose2d module (bias=False)."""

    def __init__(self, in_channels, out_channels, kernel_size, stride=1,
                 padding=0, *, key):
        self.in_channels = in_channels
        self.out_channels = out_channels
        self.kernel_size = _force_pair(kernel_size)
        self.stride = stride
        self.padding = padding
        kh, kw = self.kernel_size
        sf = 1.0 / (out_channels * kh * kw) ** 0.5
        u = jax.random.uniform(key, (in_channels, out_channels, kh, kw),
                               dtype=jnp.float32)
        self.weight = sf * (2.0 * u - 1.0)
        self._fwd = jax.jit(functools.partial(conv_transpose2d_pallas,
                                              stride=self.stride,
                                              padding=self.padding))

    def __call__(self, x):
        return self._fwd(x, self.weight)


if __name__ == "__main__":
    key = jax.random.PRNGKey(0)
    k_w, k_x = jax.random.split(key)

    # DCGAN-style layer: B=2, IC=4, OC=8, H=W=16, kernel=4, stride=2, pad=1.
    B, IC, OC, H, W = 2, 4, 8, 16, 16
    KSIZE, STRIDE, PAD = 4, 2, 1

    module = ConvTranspose2dPallas(IC, OC, KSIZE, stride=STRIDE, padding=PAD, key=k_w)
    x = jax.random.normal(k_x, (B, IC, H, W), dtype=jnp.float32)

    out = jax.block_until_ready(module(x))

    def reference(xv, wv, stride, padding):
        shh, sww = _force_pair(stride)
        phh, pww = _force_pair(padding)
        kh, kw = wv.shape[-2:]
        return jax.lax.conv_general_dilated(
            xv,
            jnp.flip(wv, axis=(-1, -2)).transpose(1, 0, 2, 3),       # (OC, IC, kh, kw)
            window_strides=(1, 1),
            padding=[(kh - 1 - phh, kh - 1 - phh), (kw - 1 - pww, kw - 1 - pww)],
            lhs_dilation=(shh, sww),
            dimension_numbers=("NCHW", "OIHW", "NCHW"),
        )

    expected_oh = (H - 1) * STRIDE + KSIZE - 2 * PAD
    assert out.shape == (B, OC, expected_oh, expected_oh), out.shape
    ref = reference(x, module.weight, STRIDE, PAD)
    assert jnp.allclose(out, ref, atol=1e-4, rtol=1e-4), "mismatch vs reference"

    # Extra configs: the stride-1 (fused, G=1) path and the non-uniform
    # sub-pixel fallback path.
    for ksz, stride, pad in [(3, 1, 1), (5, 3, 2)]:
        kw_, kx_ = jax.random.split(jax.random.PRNGKey(ksz))
        w2 = 0.1 * jax.random.normal(kw_, (3, 5, ksz, ksz), dtype=jnp.float32)
        x2 = jax.random.normal(kx_, (2, 3, 7, 9), dtype=jnp.float32)
        got = jax.block_until_ready(conv_transpose2d_pallas(x2, w2, stride, pad))
        want = reference(x2, w2, stride, pad)
        assert got.shape == want.shape, (got.shape, want.shape)
        assert jnp.allclose(got, want, atol=1e-4, rtol=1e-4), (ksz, stride, pad)

    # bf16 compute path (f32 accumulation) -- lossy vs the f32 reference.
    out_bf16 = jax.block_until_ready(
        conv_transpose2d_pallas(x, module.weight, STRIDE, PAD,
                                input_dtype=jnp.bfloat16))
    assert out_bf16.shape == ref.shape
    assert jnp.allclose(out_bf16, ref, atol=2e-2, rtol=2e-2), "bf16 path mismatch"

    print("KERNEL_OK")
</pallas_src>

<mosaic_0001>
module attributes {stable_mosaic.version = 11 : i64} {
  func.func @_mm_kernel_single_k(%arg0: i32, %arg1: i32, %arg2: i32, %arg3: memref<512x16xf32, #tpu.memory_space<vmem>>, %arg4: memref<16x128xf32, #tpu.memory_space<vmem>>, %arg5: memref<512x128xf32, #tpu.memory_space<vmem>>) attributes {dimension_semantics = [#tpu.dimension_semantics<parallel>, #tpu.dimension_semantics<parallel>, #tpu.dimension_semantics<parallel>], iteration_bounds = array<i64: 4, 1, 1>, scalar_prefetch = 0 : i64, scratch_operands = 0 : i64, tpu.core_type = #tpu.core_type<tc>, window_params = [{transform_indices = @transform_0, window_bounds = array<i64: 512, 16>}, {transform_indices = @transform_1, window_bounds = array<i64: 16, 128>}, {transform_indices = @transform_2, window_bounds = array<i64: 512, 128>}]} {
    %c0 = arith.constant 0 : index
    %c0_0 = arith.constant 0 : index
    %0 = vector.load %arg3[%c0, %c0_0] : memref<512x16xf32, #tpu.memory_space<vmem>>, vector<512x16xf32>
    %c0_1 = arith.constant 0 : index
    %c0_2 = arith.constant 0 : index
    %1 = vector.load %arg4[%c0_1, %c0_2] : memref<16x128xf32, #tpu.memory_space<vmem>>, vector<16x128xf32>
    %cst = arith.constant dense<0.000000e+00> : vector<512x128xf32>
    %2 = tpu.matmul %0, %1, %cst {dimension_numbers = #tpu.dot_dimension_numbers<[1], [0], [0], [1], [0, 0, 1, 1], [], []>} : vector<512x16xf32>, vector<16x128xf32>, vector<512x128xf32> -> vector<512x128xf32>
    %c0_3 = arith.constant 0 : index
    %c0_4 = arith.constant 0 : index
    %3 = vector.load %arg5[%c0_3, %c0_4] : memref<512x128xf32, #tpu.memory_space<vmem>>, vector<512x128xf32>
    tpu.vector_store %arg5[%c0_3, %c0_4], %2 {strides = array<i32>} : memref<512x128xf32, #tpu.memory_space<vmem>>, vector<512x128xf32>,
    return
  }
  func.func @transform_0(%arg0: i32, %arg1: i32, %arg2: i32) -> (i32, i32) {
    %c1_i32 = arith.constant 1 : i32
    %0 = arith.muli %arg0, %c1_i32 : i32
    %1 = arith.addi %0, %arg2 : i32
    %c0_i32 = arith.constant 0 : i32
    %c0_i32_0 = arith.constant 0 : i32
    return %1, %c0_i32 : i32, i32
  }
  func.func @transform_1(%arg0: i32, %arg1: i32, %arg2: i32) -> (i32, i32) {
    %c0_i32 = arith.constant 0 : i32
    return %arg0, %arg1 : i32, i32
  }
  func.func @transform_2(%arg0: i32, %arg1: i32, %arg2: i32) -> (i32, i32) {
    %c1_i32 = arith.constant 1 : i32
    %0 = arith.muli %arg0, %c1_i32 : i32
    %1 = arith.addi %0, %arg2 : i32
    %c0_i32 = arith.constant 0 : i32
    return %1, %arg1 : i32, i32
  }
}

</mosaic_0001>

<llo_original>
// kernel: conv_transpose2d_pallas.1
$region0: #{conv_transpose2d_pallas.1}
  #allocation0 [shape = 'u32[]', space=smem, size = 0x4, offset = 0x4, fixed_abs, tag = 'smem constant byte address 0x4 - core index']
  #allocation1 [shape = 'u32[144,128]{1,0:T(1,128)}', space=vmem, size = 0x12000, scoped, tag = 'internal scratch']
  %s0 = inlined_call_operand.vmem [shape: f32[2048,16], index: 0, kind: input, shape index: {}]
  %s1 = inlined_call_operand.vmem [shape: f32[64,128], index: 1, kind: input, shape index: {}]
  %s2 = inlined_call_operand.vmem [shape: f32[2048,128], index: 2, kind: output, shape index: {}]
  %s3 = sld [smem:[#allocation0]]
  $region41: #{conv_transpose2d_pallas.1} parent=0
    _
  %s5 = ssub.s32 1, %s3
  %s6 = scalar_select 0, %s5, %s3
  loop: start=0, step=1, limit=6
  $region2: #{conv_transpose2d_pallas.1} parent=0 // loop_pre_header
    _
  $region3: #{conv_transpose2d_pallas.1} parent=0 // loop_header
    %s8 = sphi 0, %s12
    %p9 = scmp.ge.s32.totalorder %s8, 6
    %s15 = sphi 0, %s34
    %s16 = sphi 0, %s30
    %s17 = sphi 0, %s26
    %s18 = sphi 0, %s15
    %s19 = sphi 0, %s16
    %s20 = sphi 0, %s17
    %s21 = sphi 0, %s18
    %s22 = sphi 0, %s19
    %s23 = sphi 0, %s20
    %s39 = sphi 0, %s41
    %s42 = sphi 0, %s39
    %s43 = sphi 0, %s42
    %s59 = sphi 0, %s43
    %s67 = sphi 0, %s69
    %s70 = sphi 0, %s67
    %s71 = sphi 0, %s70
    %s87 = sphi 0, %s71
    %s97 = sphi 0, %s99
    %s100 = sphi 0, %s97
    %s101 = sphi 0, %s100
    %s117 = sphi 0, %s101
  $region4: #{conv_transpose2d_pallas.1} parent=0 // loop_header_branch
    %11 = sbr.rel (%p9) target = $region8
  $region5: #{conv_transpose2d_pallas.1} parent=0 // loop_body
    %s13 = ssub.s32 %s8, 1
    %s14 = ssub.s32 %s8, 2
    %s24 = sadd.s32 1, %s17
    %p25 = scmp.ge.s32.totalorder %s24, 1
    %s26 = scalar_select %p25, 0, %s24
    %s27 = sadd.s32 1, %s16
    %s28 = scalar_select %p25, %s27, %s16
    %p29 = scmp.ge.s32.totalorder %s28, 1
    %s30 = scalar_select %p29, 0, %s28
    %s31 = sadd.s32 1, %s15
    %s32 = scalar_select %p29, %s31, %s15
    %p33 = scmp.ge.s32.totalorder %s32, 4
    %s34 = scalar_select %p33, 0, %s32
    %s35 = sadd.s32 %s15, %s17
    %s36 = sadd.s32 %s34, %s26
    %s37 = ssub.s32 %s35, %s36
    %p38 = scmp.eq.s32.totalorder %s37, 0
    %s40 = sadd.s32 %s39, 1
    %s41 = scalar_select %p38, %s39, %s40
    %p44 = pneg %p38
    %p45 = scmp.eq.s32.totalorder %s8, 3
    %p46 = por %p44, %p45
    %p47 = scmp.ne.s32.totalorder %s39, %s42
    %p48 = scmp.eq.s32.totalorder %s8, 0
    %p49 = por %p47, %p48
    %p50 = scmp.ne.s32.totalorder %s39, %s42
    %p51 = scmp.eq.s32.totalorder %s13, 3
    %p52 = por %p50, %p51
    %p53 = scmp.ne.s32.totalorder %s42, %s43
    %p54 = scmp.eq.s32.totalorder %s13, 0
    %p55 = por %p53, %p54
    %p56 = scmp.ne.s32.totalorder %s42, %s43
    %p57 = scmp.eq.s32.totalorder %s14, 3
    %p58 = por %p56, %p57
    %p60 = scmp.ne.s32.totalorder %s43, %s59
    %p61 = scmp.eq.s32.totalorder %s14, 0
    %p62 = por %p60, %p61
    %s63 = ssub.s32 %s15, %s34
    %s64 = ssub.s32 %s16, %s30
    %s65 = sor.u32 %s63, %s64
    %p66 = scmp.eq.s32.totalorder %s65, 0
    %s68 = sadd.s32 %s67, 1
    %s69 = scalar_select %p66, %s67, %s68
    %p72 = pneg %p66
    %p73 = scmp.eq.s32.totalorder %s8, 3
    %p74 = por %p72, %p73
    %p75 = scmp.ne.s32.totalorder %s67, %s70
    %p76 = scmp.eq.s32.totalorder %s8, 0
    %p77 = por %p75, %p76
    %p78 = scmp.ne.s32.totalorder %s67, %s70
    %p79 = scmp.eq.s32.totalorder %s13, 3
    %p80 = por %p78, %p79
    %p81 = scmp.ne.s32.totalorder %s70, %s71
    %p82 = scmp.eq.s32.totalorder %s13, 0
    %p83 = por %p81, %p82
    %p84 = scmp.ne.s32.totalorder %s70, %s71
    %p85 = scmp.eq.s32.totalorder %s14, 3
    %p86 = por %p84, %p85
    %p88 = scmp.ne.s32.totalorder %s71, %s87
    %p89 = scmp.eq.s32.totalorder %s14, 0
    %p90 = por %p88, %p89
    %s91 = sadd.s32 %s15, %s17
    %s92 = sadd.s32 %s34, %s26
    %s93 = ssub.s32 %s91, %s92
    %s94 = ssub.s32 %s16, %s30
    %s95 = sor.u32 %s93, %s94
    %p96 = scmp.eq.s32.totalorder %s95, 0
    %s98 = sadd.s32 %s97, 1
    %s99 = scalar_select %p96, %s97, %s98
    %p102 = pneg %p96
    %p103 = scmp.eq.s32.totalorder %s8, 3
    %p104 = por %p102, %p103
    %p105 = scmp.ne.s32.totalorder %s97, %s100
    %p106 = scmp.eq.s32.totalorder %s8, 0
    %p107 = por %p105, %p106
    %p108 = scmp.ne.s32.totalorder %s97, %s100
    %p109 = scmp.eq.s32.totalorder %s13, 3
    %p110 = por %p108, %p109
    %p111 = scmp.ne.s32.totalorder %s100, %s101
    %p112 = scmp.eq.s32.totalorder %s13, 0
    %p113 = por %p111, %p112
    %p114 = scmp.ne.s32.totalorder %s100, %s101
    %p115 = scmp.eq.s32.totalorder %s14, 3
    %p116 = por %p114, %p115
    %p118 = scmp.ne.s32.totalorder %s101, %s117
    %p119 = scmp.eq.s32.totalorder %s14, 0
    %p120 = por %p118, %p119
    %p121 = scmp.le.s32.totalorder 1, %s8
    %p122 = scmp.lt.s32.totalorder %s8, 5
    %p123 = pnand %p121, %p122
    %p124 = pneg %p123
    // Predicated region
    $region9: #{conv_transpose2d_pallas.1} parent=5 // pred_check
      _
    $region10: #{conv_transpose2d_pallas.1} parent=5 // pred_check_branch
      %126 = sbr.rel (%p123) target = $region12
    $region11: #{conv_transpose2d_pallas.1} parent=5 // pred_region
      %s127 = ssub.s32 %s8, 1
    $region12: #{conv_transpose2d_pallas.1} parent=5 // pred_fallthru
      _
    %p128 = scmp.lt.s32.totalorder %s8, 4
    // Predicated region
    $region13: #{conv_transpose2d_pallas.1} parent=5 // pred_check
      %p129 = pneg %p128
    $region14: #{conv_transpose2d_pallas.1} parent=5 // pred_check_branch
      %131 = sbr.rel (%p129) target = $region16
    $region15: #{conv_transpose2d_pallas.1} parent=5 // pred_region
      // Predicated region
      $region17: #{conv_transpose2d_pallas.1} parent=15 // pred_check
        %p132 = pneg %p49
      $region18: #{conv_transpose2d_pallas.1} parent=15 // pred_check_branch
        %134 = sbr.rel (%p132) target = $region20
      $region19: #{conv_transpose2d_pallas.1} parent=15 // pred_region
        %s135 = sadd.s32 %s15, %s17
        %s136 = smul.u32 64, %s135
        %p137 = scmp.lt.s32.totalorder %s136, 255
        %s138 = scalar_select %p137, %s136, 255
        %s139 = smul.addr %s138, 8
        %s140 = scalar_lea.vmem %s0, %s139
        %s141 = sadd.s32 %s15, %s17
        %s142 = smul.u32 64, %s141
      $region20: #{conv_transpose2d_pallas.1} parent=15 // pred_fallthru
        _
      // Predicated region
      $region21: #{conv_transpose2d_pallas.1} parent=15 // pred_check
        %p143 = pneg %p77
      $region22: #{conv_transpose2d_pallas.1} parent=15 // pred_check_branch
        %145 = sbr.rel (%p143) target = $region24
      $region23: #{conv_transpose2d_pallas.1} parent=15 // pred_region
        %s146 = smul.u32 2, %s15
        %p147 = scmp.lt.s32.totalorder %s146, 7
        %s148 = scalar_select %p147, %s146, 7
        %p149 = scmp.lt.s32.totalorder %s16, 0
        %s150 = scalar_select %p149, %s16, 0
        %s151 = sadd.s32 %s150, %s148
        %s152 = smul.addr %s151, 8
        %s153 = scalar_lea.vmem %s1, %s152
        %s154 = smul.u32 2, %s15
      $region24: #{conv_transpose2d_pallas.1} parent=15 // pred_fallthru
        _
    $region16: #{conv_transpose2d_pallas.1} parent=5 // pred_fallthru
      _
    %p155 = scmp.le.s32.totalorder 1, %s8
    %p156 = scmp.lt.s32.totalorder %s8, 5
    %p157 = pnand %p155, %p156
    %p158 = pneg %p157
    // Predicated region
    $region25: #{conv_transpose2d_pallas.1} parent=5 // pred_check
      _
    $region26: #{conv_transpose2d_pallas.1} parent=5 // pred_check_branch
      %160 = sbr.rel (%p157) target = $region28
    $region27: #{conv_transpose2d_pallas.1} parent=5 // pred_region
      %s161 = ssub.s32 %s8, 1
      %s162 = sadd.s32 %s18, %s20
      %s163 = smul.u32 64, %s162
      %p164 = scmp.lt.s32.totalorder %s163, 255
      %s165 = scalar_select %p164, %s163, 255
      %s166 = smul.addr %s165, 8
      %s167 = scalar_lea.vmem %s0, %s166
      %p168 = pneg %p55
      %p169 = pneg %p52
      %s170 = smul.u32 2, %s18
      %p171 = scmp.lt.s32.totalorder %s170, 7
      %s172 = scalar_select %p171, %s170, 7
      %p173 = scmp.lt.s32.totalorder %s19, 0
      %s174 = scalar_select %p173, %s19, 0
      %s175 = sadd.s32 %s174, %s172
      %s176 = smul.addr %s175, 8
      %s177 = scalar_lea.vmem %s1, %s176
      %p178 = pneg %p83
      %p179 = pneg %p80
      %p180 = pneg %p113
      %p181 = pneg %p110
      %s182 = sadd.s32 %s18, %s20
      %s183 = smul.u32 64, %s182
      %p184 = scmp.lt.s32.totalorder %s183, 255
      %s185 = scalar_select %p184, %s183, 255
      %p186 = scmp.lt.s32.totalorder %s19, 0
      %s187 = scalar_select %p186, %s19, 0
      %s188 = sadd.s32 %s187, %s185
      %s189 = smul.addr %s188, 8
      %s190 = scalar_lea.vmem %s2, %s189
      %s191 = sadd.s32 %s18, %s20
      %s192 = smul.u32 64, %s191
      %p193 = scmp.lt.s32.totalorder %s192, 255
      %s194 = scalar_select %p193, %s192, 255
      %s195 = smul.addr %s194, 8
      %s196 = scalar_lea.vmem %s0, %s195
      %s197 = sadd.s32 %s18, %s20
      %s198 = smul.u32 64, %s197
      %s199 = smul.u32 2, %s18
      %p200 = scmp.lt.s32.totalorder %s199, 7
      %s201 = scalar_select %p200, %s199, 7
      %p202 = scmp.lt.s32.totalorder %s19, 0
      %s203 = scalar_select %p202, %s19, 0
      %s204 = sadd.s32 %s203, %s201
      %s205 = smul.addr %s204, 8
      %s206 = scalar_lea.vmem %s1, %s205
      %s207 = smul.u32 2, %s18
      %s208 = sadd.s32 %s18, %s20
      %s209 = smul.u32 64, %s208
      %p210 = scmp.lt.s32.totalorder %s209, 255
      %s211 = scalar_select %p210, %s209, 255
      %p212 = scmp.lt.s32.totalorder %s19, 0
      %s213 = scalar_select %p212, %s19, 0
      %s214 = sadd.s32 %s213, %s211
      %s215 = smul.addr %s214, 8
      %s216 = scalar_lea.vmem %s2, %s215
      %s217 = sadd.s32 %s18, %s20
      %s218 = smul.u32 64, %s217
      %v219 = vld [vmem:[%s196] sm:$0xff]
      %v220 = vld [vmem:[%s196 + $0x8] sm:$0xff]
      %v221 = vld [vmem:[%s196 + $0x10] sm:$0xff]
      %v222 = vld [vmem:[%s196 + $0x18] sm:$0xff]
      %v223 = vld [vmem:[%s196 + $0x20] sm:$0xff]
      %v224 = vld [vmem:[%s196 + $0x28] sm:$0xff]
      %v225 = vld [vmem:[%s196 + $0x30] sm:$0xff]
      %v226 = vld [vmem:[%s196 + $0x38] sm:$0xff]
      %v227 = vld [vmem:[%s196 + $0x40] sm:$0xff]
      %v228 = vld [vmem:[%s196 + $0x48] sm:$0xff]
      %v229 = vld [vmem:[%s196 + $0x50] sm:$0xff]
      %v230 = vld [vmem:[%s196 + $0x58] sm:$0xff]
      %v231 = vld [vmem:[%s196 + $0x60] sm:$0xff]
      %v232 = vld [vmem:[%s196 + $0x68] sm:$0xff]
      %v233 = vld [vmem:[%s196 + $0x70] sm:$0xff]
      %v234 = vld [vmem:[%s196 + $0x78] sm:$0xff]
      %v235 = vld [vmem:[%s196 + $0x80] sm:$0xff]
      %v236 = vld [vmem:[%s196 + $0x88] sm:$0xff]
      %v237 = vld [vmem:[%s196 + $0x90] sm:$0xff]
      %v238 = vld [vmem:[%s196 + $0x98] sm:$0xff]
      %v239 = vld [vmem:[%s196 + $0xa0] sm:$0xff]
      %v240 = vld [vmem:[%s196 + $0xa8] sm:$0xff]
      %v241 = vld [vmem:[%s196 + $0xb0] sm:$0xff]
      %v242 = vld [vmem:[%s196 + $0xb8] sm:$0xff]
      %v243 = vld [vmem:[%s196 + $0xc0] sm:$0xff]
      %v244 = vld [vmem:[%s196 + $0xc8] sm:$0xff]
      %v245 = vld [vmem:[%s196 + $0xd0] sm:$0xff]
      %v246 = vld [vmem:[%s196 + $0xd8] sm:$0xff]
      %v247 = vld [vmem:[%s196 + $0xe0] sm:$0xff]
      %v248 = vld [vmem:[%s196 + $0xe8] sm:$0xff]
      %v249 = vld [vmem:[%s196 + $0xf0] sm:$0xff]
      %v250 = vld [vmem:[%s196 + $0xf8] sm:$0xff]
      %v251 = vld [vmem:[%s196 + $0x100] sm:$0xff]
      %v252 = vld [vmem:[%s196 + $0x108] sm:$0xff]
      %v253 = vld [vmem:[%s196 + $0x110] sm:$0xff]
      %v254 = vld [vmem:[%s196 + $0x118] sm:$0xff]
      %v255 = vld [vmem:[%s196 + $0x120] sm:$0xff]
      %v256 = vld [vmem:[%s196 + $0x128] sm:$0xff]
      %v257 = vld [vmem:[%s196 + $0x130] sm:$0xff]
      %v258 = vld [vmem:[%s196 + $0x138] sm:$0xff]
      %v259 = vld [vmem:[%s196 + $0x140] sm:$0xff]
      %v260 = vld [vmem:[%s196 + $0x148] sm:$0xff]
      %v261 = vld [vmem:[%s196 + $0x150] sm:$0xff]
      %v262 = vld [vmem:[%s196 + $0x158] sm:$0xff]
      %v263 = vld [vmem:[%s196 + $0x160] sm:$0xff]
      %v264 = vld [vmem:[%s196 + $0x168] sm:$0xff]
      %v265 = vld [vmem:[%s196 + $0x170] sm:$0xff]
      %v266 = vld [vmem:[%s196 + $0x178] sm:$0xff]
      %v267 = vld [vmem:[%s196 + $0x180] sm:$0xff]
      %v268 = vld [vmem:[%s196 + $0x188] sm:$0xff]
      %v269 = vld [vmem:[%s196 + $0x190] sm:$0xff]
      %v270 = vld [vmem:[%s196 + $0x198] sm:$0xff]
      %v271 = vld [vmem:[%s196 + $0x1a0] sm:$0xff]
      %v272 = vld [vmem:[%s196 + $0x1a8] sm:$0xff]
      %v273 = vld [vmem:[%s196 + $0x1b0] sm:$0xff]
      %v274 = vld [vmem:[%s196 + $0x1b8] sm:$0xff]
      %v275 = vld [vmem:[%s196 + $0x1c0] sm:$0xff]
      %v276 = vld [vmem:[%s196 + $0x1c8] sm:$0xff]
      %v277 = vld [vmem:[%s196 + $0x1d0] sm:$0xff]
      %v278 = vld [vmem:[%s196 + $0x1d8] sm:$0xff]
      %v279 = vld [vmem:[%s196 + $0x1e0] sm:$0xff]
      %v280 = vld [vmem:[%s196 + $0x1e8] sm:$0xff]
      %v281 = vld [vmem:[%s196 + $0x1f0] sm:$0xff]
      %v282 = vld [vmem:[%s196 + $0x1f8] sm:$0xff]
      %v283 = vld [vmem:[%s206] sm:$0xff]
      %v284 = vld [vmem:[%s206 + $0x8] sm:$0xff]
      %vm285 = vcmask 130048
      %v287 = vsel %vm285, %v219, 0
      %v290 = vsel %vm285, %v220, 0
      %v293 = vsel %vm285, %v221, 0
      %v296 = vsel %vm285, %v222, 0
      %v299 = vsel %vm285, %v223, 0
      %v302 = vsel %vm285, %v224, 0
      %v305 = vsel %vm285, %v225, 0
      %v308 = vsel %vm285, %v226, 0
      %v311 = vsel %vm285, %v227, 0
      %v314 = vsel %vm285, %v228, 0
      %v317 = vsel %vm285, %v229, 0
      %v320 = vsel %vm285, %v230, 0
      %v323 = vsel %vm285, %v231, 0
      %v326 = vsel %vm285, %v232, 0
      %v329 = vsel %vm285, %v233, 0
      %v332 = vsel %vm285, %v234, 0
      %v335 = vsel %vm285, %v235, 0
      %v338 = vsel %vm285, %v236, 0
      %v341 = vsel %vm285, %v237, 0
      %v344 = vsel %vm285, %v238, 0
      %v347 = vsel %vm285, %v239, 0
      %v350 = vsel %vm285, %v240, 0
      %v353 = vsel %vm285, %v241, 0
      %v356 = vsel %vm285, %v242, 0
      %v359 = vsel %vm285, %v243, 0
      %v362 = vsel %vm285, %v244, 0
      %v365 = vsel %vm285, %v245, 0
      %v368 = vsel %vm285, %v246, 0
      %v371 = vsel %vm285, %v247, 0
      %v374 = vsel %vm285, %v248, 0
      %v377 = vsel %vm285, %v249, 0
      %v380 = vsel %vm285, %v250, 0
      %v383 = vsel %vm285, %v251, 0
      %v386 = vsel %vm285, %v252, 0
      %v389 = vsel %vm285, %v253, 0
      %v392 = vsel %vm285, %v254, 0
      %v395 = vsel %vm285, %v255, 0
      %v398 = vsel %vm285, %v256, 0
      %v401 = vsel %vm285, %v257, 0
      %v404 = vsel %vm285, %v258, 0
      %v407 = vsel %vm285, %v259, 0
      %v410 = vsel %vm285, %v260, 0
      %v413 = vsel %vm285, %v261, 0
      %v416 = vsel %vm285, %v262, 0
      %v419 = vsel %vm285, %v263, 0
      %v422 = vsel %vm285, %v264, 0
      %v425 = vsel %vm285, %v265, 0
      %v428 = vsel %vm285, %v266, 0
      %v431 = vsel %vm285, %v267, 0
      %v434 = vsel %vm285, %v268, 0
      %v437 = vsel %vm285, %v269, 0
      %v440 = vsel %vm285, %v270, 0
      %v443 = vsel %vm285, %v271, 0
      %v446 = vsel %vm285, %v272, 0
      %v449 = vsel %vm285, %v273, 0
      %v452 = vsel %vm285, %v274, 0
      %v455 = vsel %vm285, %v275, 0
      %v458 = vsel %vm285, %v276, 0
      %v461 = vsel %vm285, %v277, 0
      %v464 = vsel %vm285, %v278, 0
      %v467 = vsel %vm285, %v279, 0
      %v470 = vsel %vm285, %v280, 0
      %v473 = vsel %vm285, %v281, 0
      %v476 = vsel %vm285, %v282, 0
      %478 = vmatprep.subr.mxu0 0.0
      %479 = vmatpush1.msra.mxu0 %v283
      %480 = vmatprep.subr.mxu0 0.0
      %481 = vmatpush1.msra.mxu0 %v284
      %482 = vmatprep.subr.mxu0 0.0
      %483 = vmatpush1.msra.mxu0 0.0
      %484 = vmatprep.subr.mxu0 0.0
      %485 = vmatpush1.msra.mxu0 0.0
      %486 = vmatprep.subr.mxu0 0.0
      %487 = vmatpush1.msra.mxu0 0.0
      %488 = vmatprep.subr.mxu0 0.0
      %489 = vmatpush1.msra.mxu0 0.0
      %490 = vmatprep.subr.mxu0 0.0
      %491 = vmatpush1.msra.mxu0 0.0
      %492 = vmatprep.subr.mxu0 0.0
      %493 = vmatpush1.msra.mxu0 0.0
      %494 = vmatprep.subr.mxu0 0.0
      %495 = vmatpush1.msra.mxu0 0.0
      %496 = vmatprep.subr.mxu0 0.0
      %497 = vmatpush1.msra.mxu0 0.0
      %498 = vmatprep.subr.mxu0 0.0
      %499 = vmatpush1.msra.mxu0 0.0
      %500 = vmatprep.subr.mxu0 0.0
      %501 = vmatpush1.msra.mxu0 0.0
      %502 = vmatprep.subr.mxu0 0.0
      %503 = vmatpush1.msra.mxu0 0.0
      %504 = vmatprep.subr.mxu0 0.0
      %505 = vmatpush1.msra.mxu0 0.0
      %506 = vmatprep.subr.mxu0 0.0
      %507 = vmatpush1.msra.mxu0 0.0
      %508 = vmatprep.subr.mxu0 0.0
      %509 = vmatpush1.msra.mxu0 0.0
      %510 = vmatprep.subr.mxu0 0.0
      %511 = vmatpush1.msra.mxu0 0.0
      %512 = vmatprep.subr.mxu0 0.0
      %513 = vmatpush1.msra.mxu0 0.0
      %514 = vmatprep.subr.mxu0 0.0
      %515 = vmatpush1.msra.mxu0 0.0
      %516 = vmatprep.subr.mxu0 0.0
      %517 = vmatpush1.msra.mxu0 0.0
      %518 = vmatprep.subr.mxu0 0.0
      %519 = vmatpush1.msra.mxu0 0.0
      %520 = vmatprep.subr.mxu0 0.0
      %521 = vmatpush1.msra.mxu0 0.0
      %522 = vmatprep.subr.mxu0 0.0
      %523 = vmatpush1.msra.mxu0 0.0
      %524 = vmatprep.subr.mxu0 0.0
      %525 = vmatpush1.msra.mxu0 0.0
      %526 = vmatprep.subr.mxu0 0.0
      %527 = vmatpush1.msra.mxu0 0.0
      %528 = vmatprep.subr.mxu0 0.0
      %529 = vmatpush1.msra.mxu0 0.0
      %530 = vmatprep.subr.mxu0 0.0
      %531 = vmatpush1.msra.mxu0 0.0
      %532 = vmatprep.subr.mxu0 0.0
      %533 = vmatpush1.msra.mxu0 0.0
      %534 = vmatprep.subr.mxu0 0.0
      %535 = vmatpush1.msra.mxu0 0.0
      %536 = vmatprep.subr.mxu0 0.0
      %537 = vmatpush1.msra.mxu0 0.0
      %538 = vmatprep.subr.mxu0 0.0
      %539 = vmatpush1.msra.mxu0 0.0
      %540 = vmatprep.subr.mxu0 0.0
      %541 = vmatpush1.msra.mxu0 0.0
      %542 = vmatprep.mubr.f32.mxu0 0.0
      %543 = vmatmul.mubr.f32.gmra.mrb[0].mxu0 %v287
      %v544 = vpop.f32.mrb[0].mxu0
      %v545 = vadd.f32 0.0, %v544
      %v546 = vpop.f32.mrb[0].mxu0
      %547 = vmatprep.mubr.f32.mxu0 0.0
      %548 = vmatmul.mubr.f32.gmra.mrb[0].mxu0 %v290
      %v549 = vpop.f32.mrb[0].mxu0
      %v550 = vadd.f32 0.0, %v549
      %v551 = vpop.f32.mrb[0].mxu0
      %552 = vmatprep.mubr.f32.mxu0 0.0
      %553 = vmatmul.mubr.f32.gmra.mrb[0].mxu0 %v293
      %v554 = vpop.f32.mrb[0].mxu0
      %v555 = vadd.f32 0.0, %v554
      %v556 = vpop.f32.mrb[0].mxu0
      %557 = vmatprep.mubr.f32.mxu0 0.0
      %558 = vmatmul.mubr.f32.gmra.mrb[0].mxu0 %v296
      %v559 = vpop.f32.mrb[0].mxu0
      %v560 = vadd.f32 0.0, %v559
      %v561 = vpop.f32.mrb[0].mxu0
      %562 = vmatprep.mubr.f32.mxu0 0.0
      %563 = vmatmul.mubr.f32.gmra.mrb[0].mxu0 %v299
      %v564 = vpop.f32.mrb[0].mxu0
      %v565 = vadd.f32 0.0, %v564
      %v566 = vpop.f32.mrb[0].mxu0
      %567 = vmatprep.mubr.f32.mxu0 0.0
      %568 = vmatmul.mubr.f32.gmra.mrb[0].mxu0 %v302
      %v569 = vpop.f32.mrb[0].mxu0
      %v570 = vadd.f32 0.0, %v569
      %v571 = vpop.f32.mrb[0].mxu0
      %572 = vmatprep.mubr.f32.mxu0 0.0
      %573 = vmatmul.mubr.f32.gmra.mrb[0].mxu0 %v305
      %v574 = vpop.f32.mrb[0].mxu0
      %v575 = vadd.f32 0.0, %v574
      %v576 = vpop.f32.mrb[0].mxu0
      %577 = vmatprep.mubr.f32.mxu0 0.0
      %578 = vmatmul.mubr.f32.gmra.mrb[0].mxu0 %v308
      %v579 = vpop.f32.mrb[0].mxu0
      %v580 = vadd.f32 0.0, %v579
      %v581 = vpop.f32.mrb[0].mxu0
      %582 = vmatprep.mubr.f32.mxu0 0.0
      %583 = vmatmul.mubr.f32.gmra.mrb[0].mxu0 %v311
      %v584 = vpop.f32.mrb[0].mxu0
      %v585 = vadd.f32 0.0, %v584
      %v586 = vpop.f32.mrb[0].mxu0
      %587 = vmatprep.mubr.f32.mxu0 0.0
      %588 = vmatmul.mubr.f32.gmra.mrb[0].mxu0 %v314
      %v589 = vpop.f32.mrb[0].mxu0
      %v590 = vadd.f32 0.0, %v589
      %v591 = vpop.f32.mrb[0].mxu0
      %592 = vmatprep.mubr.f32.mxu0 0.0
      %593 = vmatmul.mubr.f32.gmra.mrb[0].mxu0 %v317
      %v594 = vpop.f32.mrb[0].mxu0
      %v595 = vadd.f32 0.0, %v594
      %v596 = vpop.f32.mrb[0].mxu0
      %597 = vmatprep.mubr.f32.mxu0 0.0
      %598 = vmatmul.mubr.f32.gmra.mrb[0].mxu0 %v320
      %v599 = vpop.f32.mrb[0].mxu0
      %v600 = vadd.f32 0.0, %v599
      %v601 = vpop.f32.mrb[0].mxu0
      %602 = vmatprep.mubr.f32.mxu0 0.0
      %603 = vmatmul.mubr.f32.gmra.mrb[0].mxu0 %v323
      %v604 = vpop.f32.mrb[0].mxu0
      %v605 = vadd.f32 0.0, %v604
      %v606 = vpop.f32.mrb[0].mxu0
      %607 = vmatprep.mubr.f32.mxu0 0.0
      %608 = vmatmul.mubr.f32.gmra.mrb[0].mxu0 %v326
      %v609 = vpop.f32.mrb[0].mxu0
      %v610 = vadd.f32 0.0, %v609
      %v611 = vpop.f32.mrb[0].mxu0
      %612 = vmatprep.mubr.f32.mxu0 0.0
      %613 = vmatmul.mubr.f32.gmra.mrb[0].mxu0 %v329
      %v614 = vpop.f32.mrb[0].mxu0
      %v615 = vadd.f32 0.0, %v614
      %v616 = vpop.f32.mrb[0].mxu0
      %617 = vmatprep.mubr.f32.mxu0 0.0
      %618 = vmatmul.mubr.f32.gmra.mrb[0].mxu0 %v332
      %v619 = vpop.f32.mrb[0].mxu0
      %v620 = vadd.f32 0.0, %v619
      %v621 = vpop.f32.mrb[0].mxu0
      %622 = vmatprep.mubr.f32.mxu0 0.0
      %623 = vmatmul.mubr.f32.gmra.mrb[0].mxu0 %v335
      %v624 = vpop.f32.mrb[0].mxu0
      %v625 = vadd.f32 0.0, %v624
      %v626 = vpop.f32.mrb[0].mxu0
      %627 = vmatprep.mubr.f32.mxu0 0.0
      %628 = vmatmul.mubr.f32.gmra.mrb[0].mxu0 %v338
      %v629 = vpop.f32.mrb[0].mxu0
      %v630 = vadd.f32 0.0, %v629
      %v631 = vpop.f32.mrb[0].mxu0
      %632 = vmatprep.mubr.f32.mxu0 0.0
      %633 = vmatmul.mubr.f32.gmra.mrb[0].mxu0 %v341
      %v634 = vpop.f32.mrb[0].mxu0
      %v635 = vadd.f32 0.0, %v634
      %v636 = vpop.f32.mrb[0].mxu0
      %637 = vmatprep.mubr.f32.mxu0 0.0
      %638 = vmatmul.mubr.f32.gmra.mrb[0].mxu0 %v344
      %v639 = vpop.f32.mrb[0].mxu0
      %v640 = vadd.f32 0.0, %v639
      %v641 = vpop.f32.mrb[0].mxu0
      %642 = vmatprep.mubr.f32.mxu0 0.0
      %643 = vmatmul.mubr.f32.gmra.mrb[0].mxu0 %v347
      %v644 = vpop.f32.mrb[0].mxu0
      %v645 = vadd.f32 0.0, %v644
      %v646 = vpop.f32.mrb[0].mxu0
      %647 = vmatprep.mubr.f32.mxu0 0.0
      %648 = vmatmul.mubr.f32.gmra.mrb[0].mxu0 %v350
      %v649 = vpop.f32.mrb[0].mxu0
      %v650 = vadd.f32 0.0, %v649
      %v651 = vpop.f32.mrb[0].mxu0
      %652 = vmatprep.mubr.f32.mxu0 0.0
      %653 = vmatmul.mubr.f32.gmra.mrb[0].mxu0 %v353
      %v654 = vpop.f32.mrb[0].mxu0
      %v655 = vadd.f32 0.0, %v654
      %v656 = vpop.f32.mrb[0].mxu0
      %657 = vmatprep.mubr.f32.mxu0 0.0
      %658 = vmatmul.mubr.f32.gmra.mrb[0].mxu0 %v356
      %v659 = vpop.f32.mrb[0].mxu0
      %v660 = vadd.f32 0.0, %v659
      %v661 = vpop.f32.mrb[0].mxu0
      %662 = vmatprep.mubr.f32.mxu0 0.0
      %663 = vmatmul.mubr.f32.gmra.mrb[0].mxu0 %v359
      %v664 = vpop.f32.mrb[0].mxu0
      %v665 = vadd.f32 0.0, %v664
      %v666 = vpop.f32.mrb[0].mxu0
      %667 = vmatprep.mubr.f32.mxu0 0.0
      %668 = vmatmul.mubr.f32.gmra.mrb[0].mxu0 %v362
      %v669 = vpop.f32.mrb[0].mxu0
      %v670 = vadd.f32 0.0, %v669
      %v671 = vpop.f32.mrb[0].mxu0
      %672 = vmatprep.mubr.f32.mxu0 0.0
      %673 = vmatmul.mubr.f32.gmra.mrb[0].mxu0 %v365
      %v674 = vpop.f32.mrb[0].mxu0
      %v675 = vadd.f32 0.0, %v674
      %v676 = vpop.f32.mrb[0].mxu0
      %677 = vmatprep.mubr.f32.mxu0 0.0
      %678 = vmatmul.mubr.f32.gmra.mrb[0].mxu0 %v368
      %v679 = vpop.f32.mrb[0].mxu0
      %v680 = vadd.f32 0.0, %v679
      %v681 = vpop.f32.mrb[0].mxu0
      %682 = vmatprep.mubr.f32.mxu0 0.0
      %683 = vmatmul.mubr.f32.gmra.mrb[0].mxu0 %v371
      %v684 = vpop.f32.mrb[0].mxu0
      %v685 = vadd.f32 0.0, %v684
      %v686 = vpop.f32.mrb[0].mxu0
      %687 = vmatprep.mubr.f32.mxu0 0.0
      %688 = vmatmul.mubr.f32.gmra.mrb[0].mxu0 %v374
      %v689 = vpop.f32.mrb[0].mxu0
      %v690 = vadd.f32 0.0, %v689
      %v691 = vpop.f32.mrb[0].mxu0
      %692 = vmatprep.mubr.f32.mxu0 0.0
      %693 = vmatmul.mubr.f32.gmra.mrb[0].mxu0 %v377
      %v694 = vpop.f32.mrb[0].mxu0
      %v695 = vadd.f32 0.0, %v694
      %v696 = vpop.f32.mrb[0].mxu0
      %697 = vmatprep.mubr.f32.mxu0 0.0
      %698 = vmatmul.mubr.f32.gmra.mrb[0].mxu0 %v380
      %v699 = vpop.f32.mrb[0].mxu0
      %v700 = vadd.f32 0.0, %v699
      %v701 = vpop.f32.mrb[0].mxu0
      %702 = vmatprep.mubr.f32.mxu0 0.0
      %703 = vmatmul.mubr.f32.gmra.mrb[0].mxu0 %v383
      %v704 = vpop.f32.mrb[0].mxu0
      %v705 = vadd.f32 0.0, %v704
      %v706 = vpop.f32.mrb[0].mxu0
      %707 = vmatprep.mubr.f32.mxu0 0.0
      %708 = vmatmul.mubr.f32.gmra.mrb[0].mxu0 %v386
      %v709 = vpop.f32.mrb[0].mxu0
      %v710 = vadd.f32 0.0, %v709
      %v711 = vpop.f32.mrb[0].mxu0
      %712 = vmatprep.mubr.f32.mxu0 0.0
      %713 = vmatmul.mubr.f32.gmra.mrb[0].mxu0 %v389
      %v714 = vpop.f32.mrb[0].mxu0
      %v715 = vadd.f32 0.0, %v714
      %v716 = vpop.f32.mrb[0].mxu0
      %717 = vmatprep.mubr.f32.mxu0 0.0
      %718 = vmatmul.mubr.f32.gmra.mrb[0].mxu0 %v392
      %v719 = vpop.f32.mrb[0].mxu0
      %v720 = vadd.f32 0.0, %v719
      %v721 = vpop.f32.mrb[0].mxu0
      %722 = vmatprep.mubr.f32.mxu0 0.0
      %723 = vmatmul.mubr.f32.gmra.mrb[0].mxu0 %v395
      %v724 = vpop.f32.mrb[0].mxu0
      %v725 = vadd.f32 0.0, %v724
      %v726 = vpop.f32.mrb[0].mxu0
      %727 = vmatprep.mubr.f32.mxu0 0.0
      %728 = vmatmul.mubr.f32.gmra.mrb[0].mxu0 %v398
      %v729 = vpop.f32.mrb[0].mxu0
      %v730 = vadd.f32 0.0, %v729
      %v731 = vpop.f32.mrb[0].mxu0
      %732 = vmatprep.mubr.f32.mxu0 0.0
      %733 = vmatmul.mubr.f32.gmra.mrb[0].mxu0 %v401
      %v734 = vpop.f32.mrb[0].mxu0
      %v735 = vadd.f32 0.0, %v734
      %v736 = vpop.f32.mrb[0].mxu0
      %737 = vmatprep.mubr.f32.mxu0 0.0
      %738 = vmatmul.mubr.f32.gmra.mrb[0].mxu0 %v404
      %v739 = vpop.f32.mrb[0].mxu0
      %v740 = vadd.f32 0.0, %v739
      %v741 = vpop.f32.mrb[0].mxu0
      %742 = vmatprep.mubr.f32.mxu0 0.0
      %743 = vmatmul.mubr.f32.gmra.mrb[0].mxu0 %v407
      %v744 = vpop.f32.mrb[0].mxu0
      %v745 = vadd.f32 0.0, %v744
      %v746 = vpop.f32.mrb[0].mxu0
      %747 = vmatprep.mubr.f32.mxu0 0.0
      %748 = vmatmul.mubr.f32.gmra.mrb[0].mxu0 %v410
      %v749 = vpop.f32.mrb[0].mxu0
      %v750 = vadd.f32 0.0, %v749
      %v751 = vpop.f32.mrb[0].mxu0
      %752 = vmatprep.mubr.f32.mxu0 0.0
      %753 = vmatmul.mubr.f32.gmra.mrb[0].mxu0 %v413
      %v754 = vpop.f32.mrb[0].mxu0
      %v755 = vadd.f32 0.0, %v754
      %v756 = vpop.f32.mrb[0].mxu0
      %757 = vmatprep.mubr.f32.mxu0 0.0
      %758 = vmatmul.mubr.f32.gmra.mrb[0].mxu0 %v416
      %v759 = vpop.f32.mrb[0].mxu0
      %v760 = vadd.f32 0.0, %v759
      %v761 = vpop.f32.mrb[0].mxu0
      %762 = vmatprep.mubr.f32.mxu0 0.0
      %763 = vmatmul.mubr.f32.gmra.mrb[0].mxu0 %v419
      %v764 = vpop.f32.mrb[0].mxu0
      %v765 = vadd.f32 0.0, %v764
      %v766 = vpop.f32.mrb[0].mxu0
      %767 = vmatprep.mubr.f32.mxu0 0.0
      %768 = vmatmul.mubr.f32.gmra.mrb[0].mxu0 %v422
      %v769 = vpop.f32.mrb[0].mxu0
      %v770 = vadd.f32 0.0, %v769
      %v771 = vpop.f32.mrb[0].mxu0
      %772 = vmatprep.mubr.f32.mxu0 0.0
      %773 = vmatmul.mubr.f32.gmra.mrb[0].mxu0 %v425
      %v774 = vpop.f32.mrb[0].mxu0
      %v775 = vadd.f32 0.0, %v774
      %v776 = vpop.f32.mrb[0].mxu0
      %777 = vmatprep.mubr.f32.mxu0 0.0
      %778 = vmatmul.mubr.f32.gmra.mrb[0].mxu0 %v428
      %v779 = vpop.f32.mrb[0].mxu0
      %v780 = vadd.f32 0.0, %v779
      %v781 = vpop.f32.mrb[0].mxu0
      %782 = vmatprep.mubr.f32.mxu0 0.0
      %783 = vmatmul.mubr.f32.gmra.mrb[0].mxu0 %v431
      %v784 = vpop.f32.mrb[0].mxu0
      %v785 = vadd.f32 0.0, %v784
      %v786 = vpop.f32.mrb[0].mxu0
      %787 = vmatprep.mubr.f32.mxu0 0.0
      %788 = vmatmul.mubr.f32.gmra.mrb[0].mxu0 %v434
      %v789 = vpop.f32.mrb[0].mxu0
      %v790 = vadd.f32 0.0, %v789
      %v791 = vpop.f32.mrb[0].mxu0
      %792 = vmatprep.mubr.f32.mxu0 0.0
      %793 = vmatmul.mubr.f32.gmra.mrb[0].mxu0 %v437
      %v794 = vpop.f32.mrb[0].mxu0
      %v795 = vadd.f32 0.0, %v794
      %v796 = vpop.f32.mrb[0].mxu0
      %797 = vmatprep.mubr.f32.mxu0 0.0
      %798 = vmatmul.mubr.f32.gmra.mrb[0].mxu0 %v440
      %v799 = vpop.f32.mrb[0].mxu0
      %v800 = vadd.f32 0.0, %v799
      %v801 = vpop.f32.mrb[0].mxu0
      %802 = vmatprep.mubr.f32.mxu0 0.0
      %803 = vmatmul.mubr.f32.gmra.mrb[0].mxu0 %v443
      %v804 = vpop.f32.mrb[0].mxu0
      %v805 = vadd.f32 0.0, %v804
      %v806 = vpop.f32.mrb[0].mxu0
      %807 = vmatprep.mubr.f32.mxu0 0.0
      %808 = vmatmul.mubr.f32.gmra.mrb[0].mxu0 %v446
      %v809 = vpop.f32.mrb[0].mxu0
      %v810 = vadd.f32 0.0, %v809
      %v811 = vpop.f32.mrb[0].mxu0
      %812 = vmatprep.mubr.f32.mxu0 0.0
      %813 = vmatmul.mubr.f32.gmra.mrb[0].mxu0 %v449
      %v814 = vpop.f32.mrb[0].mxu0
      %v815 = vadd.f32 0.0, %v814
      %v816 = vpop.f32.mrb[0].mxu0
      %817 = vmatprep.mubr.f32.mxu0 0.0
      %818 = vmatmul.mubr.f32.gmra.mrb[0].mxu0 %v452
      %v819 = vpop.f32.mrb[0].mxu0
      %v820 = vadd.f32 0.0, %v819
      %v821 = vpop.f32.mrb[0].mxu0
      %822 = vmatprep.mubr.f32.mxu0 0.0
      %823 = vmatmul.mubr.f32.gmra.mrb[0].mxu0 %v455
      %v824 = vpop.f32.mrb[0].mxu0
      %v825 = vadd.f32 0.0, %v824
      %v826 = vpop.f32.mrb[0].mxu0
      %827 = vmatprep.mubr.f32.mxu0 0.0
      %828 = vmatmul.mubr.f32.gmra.mrb[0].mxu0 %v458
      %v829 = vpop.f32.mrb[0].mxu0
      %v830 = vadd.f32 0.0, %v829
      %v831 = vpop.f32.mrb[0].mxu0
      %832 = vmatprep.mubr.f32.mxu0 0.0
      %833 = vmatmul.mubr.f32.gmra.mrb[0].mxu0 %v461
      %v834 = vpop.f32.mrb[0].mxu0
      %v835 = vadd.f32 0.0, %v834
      %v836 = vpop.f32.mrb[0].mxu0
      %837 = vmatprep.mubr.f32.mxu0 0.0
      %838 = vmatmul.mubr.f32.gmra.mrb[0].mxu0 %v464
      %v839 = vpop.f32.mrb[0].mxu0
      %v840 = vadd.f32 0.0, %v839
      %v841 = vpop.f32.mrb[0].mxu0
      %842 = vmatprep.mubr.f32.mxu0 0.0
      %843 = vmatmul.mubr.f32.gmra.mrb[0].mxu0 %v467
      %v844 = vpop.f32.mrb[0].mxu0
      %v845 = vadd.f32 0.0, %v844
      %v846 = vpop.f32.mrb[0].mxu0
      %847 = vmatprep.mubr.f32.mxu0 0.0
      %848 = vmatmul.mubr.f32.gmra.mrb[0].mxu0 %v470
      %v849 = vpop.f32.mrb[0].mxu0
      %v850 = vadd.f32 0.0, %v849
      %v851 = vpop.f32.mrb[0].mxu0
      %852 = vmatprep.mubr.f32.mxu0 0.0
      %853 = vmatmul.mubr.f32.gmra.mrb[0].mxu0 %v473
      %v854 = vpop.f32.mrb[0].mxu0
      %v855 = vadd.f32 0.0, %v854
      %v856 = vpop.f32.mrb[0].mxu0
      %857 = vmatprep.mubr.f32.mxu0 0.0
      %858 = vmatmul.mubr.f32.gmra.mrb[0].mxu0 %v476
      %v859 = vpop.f32.mrb[0].mxu0
      %v860 = vadd.f32 0.0, %v859
      %v861 = vpop.f32.mrb[0].mxu0
      %862 = vdwg.mxu0
      %863 = vst [vmem:[%s216] sm:$0xff] %v545
      %864 = vst [vmem:[%s216 + $0x8] sm:$0xff] %v550
      %865 = vst [vmem:[%s216 + $0x10] sm:$0xff] %v555
      %866 = vst [vmem:[%s216 + $0x18] sm:$0xff] %v560
      %867 = vst [vmem:[%s216 + $0x20] sm:$0xff] %v565
      %868 = vst [vmem:[%s216 + $0x28] sm:$0xff] %v570
      %869 = vst [vmem:[%s216 + $0x30] sm:$0xff] %v575
      %870 = vst [vmem:[%s216 + $0x38] sm:$0xff] %v580
      %871 = vst [vmem:[%s216 + $0x40] sm:$0xff] %v585
      %872 = vst [vmem:[%s216 + $0x48] sm:$0xff] %v590
      %873 = vst [vmem:[%s216 + $0x50] sm:$0xff] %v595
      %874 = vst [vmem:[%s216 + $0x58] sm:$0xff] %v600
      %875 = vst [vmem:[%s216 + $0x60] sm:$0xff] %v605
      %876 = vst [vmem:[%s216 + $0x68] sm:$0xff] %v610
      %877 = vst [vmem:[%s216 + $0x70] sm:$0xff] %v615
      %878 = vst [vmem:[%s216 + $0x78] sm:$0xff] %v620
      %879 = vst [vmem:[%s216 + $0x80] sm:$0xff] %v625
      %880 = vst [vmem:[%s216 + $0x88] sm:$0xff] %v630
      %881 = vst [vmem:[%s216 + $0x90] sm:$0xff] %v635
      %882 = vst [vmem:[%s216 + $0x98] sm:$0xff] %v640
      %883 = vst [vmem:[%s216 + $0xa0] sm:$0xff] %v645
      %884 = vst [vmem:[%s216 + $0xa8] sm:$0xff] %v650
      %885 = vst [vmem:[%s216 + $0xb0] sm:$0xff] %v655
      %886 = vst [vmem:[%s216 + $0xb8] sm:$0xff] %v660
      %887 = vst [vmem:[%s216 + $0xc0] sm:$0xff] %v665
      %888 = vst [vmem:[%s216 + $0xc8] sm:$0xff] %v670
      %889 = vst [vmem:[%s216 + $0xd0] sm:$0xff] %v675
      %890 = vst [vmem:[%s216 + $0xd8] sm:$0xff] %v680
      %891 = vst [vmem:[%s216 + $0xe0] sm:$0xff] %v685
      %892 = vst [vmem:[%s216 + $0xe8] sm:$0xff] %v690
      %893 = vst [vmem:[%s216 + $0xf0] sm:$0xff] %v695
      %894 = vst [vmem:[%s216 + $0xf8] sm:$0xff] %v700
      %895 = vst [vmem:[%s216 + $0x100] sm:$0xff] %v705
      %896 = vst [vmem:[%s216 + $0x108] sm:$0xff] %v710
      %897 = vst [vmem:[%s216 + $0x110] sm:$0xff] %v715
      %898 = vst [vmem:[%s216 + $0x118] sm:$0xff] %v720
      %899 = vst [vmem:[%s216 + $0x120] sm:$0xff] %v725
      %900 = vst [vmem:[%s216 + $0x128] sm:$0xff] %v730
      %901 = vst [vmem:[%s216 + $0x130] sm:$0xff] %v735
      %902 = vst [vmem:[%s216 + $0x138] sm:$0xff] %v740
      %903 = vst [vmem:[%s216 + $0x140] sm:$0xff] %v745
      %904 = vst [vmem:[%s216 + $0x148] sm:$0xff] %v750
      %905 = vst [vmem:[%s216 + $0x150] sm:$0xff] %v755
      %906 = vst [vmem:[%s216 + $0x158] sm:$0xff] %v760
      %907 = vst [vmem:[%s216 + $0x160] sm:$0xff] %v765
      %908 = vst [vmem:[%s216 + $0x168] sm:$0xff] %v770
      %909 = vst [vmem:[%s216 + $0x170] sm:$0xff] %v775
      %910 = vst [vmem:[%s216 + $0x178] sm:$0xff] %v780
      %911 = vst [vmem:[%s216 + $0x180] sm:$0xff] %v785
      %912 = vst [vmem:[%s216 + $0x188] sm:$0xff] %v790
      %913 = vst [vmem:[%s216 + $0x190] sm:$0xff] %v795
      %914 = vst [vmem:[%s216 + $0x198] sm:$0xff] %v800
      %915 = vst [vmem:[%s216 + $0x1a0] sm:$0xff] %v805
      %916 = vst [vmem:[%s216 + $0x1a8] sm:$0xff] %v810
      %917 = vst [vmem:[%s216 + $0x1b0] sm:$0xff] %v815
      %918 = vst [vmem:[%s216 + $0x1b8] sm:$0xff] %v820
      %919 = vst [vmem:[%s216 + $0x1c0] sm:$0xff] %v825
      %920 = vst [vmem:[%s216 + $0x1c8] sm:$0xff] %v830
      %921 = vst [vmem:[%s216 + $0x1d0] sm:$0xff] %v835
      %922 = vst [vmem:[%s216 + $0x1d8] sm:$0xff] %v840
      %923 = vst [vmem:[%s216 + $0x1e0] sm:$0xff] %v845
      %924 = vst [vmem:[%s216 + $0x1e8] sm:$0xff] %v850
      %925 = vst [vmem:[%s216 + $0x1f0] sm:$0xff] %v855
      %926 = vst [vmem:[%s216 + $0x1f8] sm:$0xff] %v860
      %s927 = sadd.s32 %s18, %s20
      %s928 = smul.u32 64, %s927
      %p929 = scmp.lt.s32.totalorder %s928, 255
      %s930 = scalar_select %p929, %s928, 255
      %p931 = scmp.lt.s32.totalorder %s19, 0
      %s932 = scalar_select %p931, %s19, 0
      %s933 = sadd.s32 %s932, %s930
      %s934 = smul.addr %s933, 8
      %s935 = scalar_lea.vmem %s2, %s934
      // Predicated region
      $region29: #{conv_transpose2d_pallas.1} parent=27 // pred_check
        %p936 = pneg %p110
      $region30: #{conv_transpose2d_pallas.1} parent=27 // pred_check_branch
        %938 = sbr.rel (%p936) target = $region32
      $region31: #{conv_transpose2d_pallas.1} parent=27 // pred_region
        %s939 = sadd.s32 %s18, %s20
        %s940 = smul.u32 64, %s939
      $region32: #{conv_transpose2d_pallas.1} parent=27 // pred_fallthru
        _
    $region28: #{conv_transpose2d_pallas.1} parent=5 // pred_fallthru
      _
    %p941 = scmp.le.s32.totalorder 2, %s8
    // Predicated region
    $region33: #{conv_transpose2d_pallas.1} parent=5 // pred_check
      %p942 = pneg %p941
    $region34: #{conv_transpose2d_pallas.1} parent=5 // pred_check_branch
      %944 = sbr.rel (%p942) target = $region36
    $region35: #{conv_transpose2d_pallas.1} parent=5 // pred_region
      %s945 = ssub.s32 %s8, 2
      // Predicated region
      $region37: #{conv_transpose2d_pallas.1} parent=35 // pred_check
        %p946 = pneg %p116
      $region38: #{conv_transpose2d_pallas.1} parent=35 // pred_check_branch
        %948 = sbr.rel (%p946) target = $region40
      $region39: #{conv_transpose2d_pallas.1} parent=35 // pred_region
        %s949 = sadd.s32 %s21, %s23
        %s950 = smul.u32 64, %s949
        %p951 = scmp.lt.s32.totalorder %s950, 255
        %s952 = scalar_select %p951, %s950, 255
        %p953 = scmp.lt.s32.totalorder %s22, 0
        %s954 = scalar_select %p953, %s22, 0
        %s955 = sadd.s32 %s954, %s952
        %s956 = smul.addr %s955, 8
        %s957 = scalar_lea.vmem %s2, %s956
      $region40: #{conv_transpose2d_pallas.1} parent=35 // pred_fallthru
        _
    $region36: #{conv_transpose2d_pallas.1} parent=5 // pred_fallthru
      _
  $region6: #{conv_transpose2d_pallas.1} parent=0 // loop_footer
    %s12 = sadd.s32 1, %s8
  $region7: #{conv_transpose2d_pallas.1} parent=0 // loop_footer_branch
    %7 = sbr.rel target = $region3
  $region8: #{conv_transpose2d_pallas.1} parent=0 // loop_exit
    _

</llo_original>
